<compile_context>
chip_gen: v5e
topology: v5e:2x2
jax: 0.10.0
libtpu: 0.0.40
codegen_flags: <defaults>
</compile_context>

<pallas_src>
import functools

import jax
import jax.numpy as jnp
from jax.experimental import pallas as pl
from jax.experimental.pallas import tpu as pltpu


def top2_gating_kernel(x_ref, wt_ref, o_ref, *, eps):
    # x_ref: (tm, d) tokens x features; wt_ref: (e, d) = w_gating^T; o_ref: (e, tm).
    # logits_T = W^T @ X^T computed directly as a transposed-RHS matmul -> (e, tm):
    # gates on sublanes, tokens on (all 128) lanes.
    logits = jax.lax.dot_general(
        wt_ref[...], x_ref[...],
        dimension_numbers=(((1,), (1,)), ((), ())),
        preferred_element_type=jnp.float32)

    # softmax over the gate (sublane) axis
    logits = logits - jnp.max(logits, axis=0, keepdims=True)
    expl = jnp.exp(logits)
    raw = expl / jnp.sum(expl, axis=0, keepdims=True)            # (e, tm)

    e = raw.shape[0]
    iota = jax.lax.broadcasted_iota(jnp.int32, raw.shape, 0)     # gate ids along sublanes

    # top-1 (first occurrence on ties, matching torch.topk / F.one_hot(argmax))
    gate1 = jnp.max(raw, axis=0, keepdims=True)                  # (1, tm)
    idx1 = jnp.min(jnp.where(raw == gate1, iota, e), axis=0, keepdims=True)
    mask1 = (iota == idx1).astype(raw.dtype)

    # top-1 of the remaining gates -> second expert
    wo1 = raw * (1.0 - mask1)
    gate2 = jnp.max(wo1, axis=0, keepdims=True)
    idx2 = jnp.min(jnp.where(wo1 == gate2, iota, e), axis=0, keepdims=True)
    # idx2 can only collide with idx1 in the degenerate gate2 == 0.0 case (softmax output exactly
    # 0/1, theoretical in f32); exclude it explicitly so one slot is never double-written.
    mask2 = jnp.logical_and(iota == idx2, idx2 != idx1).astype(raw.dtype)

    denom = gate1 + gate2 + eps
    o_ref[...] = (mask1 * (gate1 / denom) + mask2 * (gate2 / denom)).astype(o_ref.dtype)


def _round_up(a, b):
    return ((a + b - 1) // b) * b


def top2_gating(x, w_gating, *, eps=1e-9, tm=1024):
    """x: (b, n, d) float32, w_gating: (d, num_gates) float32 -> (b, n, num_gates) float32."""
    b, n, d = x.shape
    e = w_gating.shape[-1]
    rows = b * n

    # Row tile: big enough to amortize per-step overhead, clamped for tiny inputs.
    tm_eff = max(8, min(tm, rows))
    tm_eff = _round_up(tm_eff, 8)                  # sublane alignment of the x tile
    rows_p = _round_up(rows, tm_eff)
    if rows_p > tm_eff and tm_eff % 128 != 0:
        # multi-tile grids need a 128-aligned lane dim on the (e, tm) output block
        tm_eff = _round_up(tm_eff, 128)
        rows_p = _round_up(rows, tm_eff)

    xf = x.reshape(rows, d)
    if rows_p != rows:
        xf = jnp.pad(xf, ((0, rows_p - rows), (0, 0)))   # zero rows -> finite gates, sliced off
    wt = w_gating.T                                       # (e, d): tiny, resident in VMEM

    out_t = pl.pallas_call(
        functools.partial(top2_gating_kernel, eps=eps),
        out_shape=jax.ShapeDtypeStruct((e, rows_p), jnp.float32),
        grid_spec=pltpu.PrefetchScalarGridSpec(
            num_scalar_prefetch=0,
            grid=(rows_p // tm_eff,),
            in_specs=[
                pl.BlockSpec((tm_eff, d), lambda i: (i, 0)),   # token tile (tokens on sublanes)
                pl.BlockSpec((e, d), lambda i: (0, 0)),        # gating weight^T, resident
            ],
            out_specs=pl.BlockSpec((e, tm_eff), lambda i: (0, i)),  # lane-dense output store
        ),
        compiler_params=pltpu.CompilerParams(
            dimension_semantics=("parallel",)),   # shards row tiles across v7x's two TCs
    )(xf, wt)

    # Cheap (num_gates, rows) -> (rows, num_gates) transpose in the wrapper; output bytes are
    # 4x smaller than the x read the kernel is bound on.
    return out_t[:, :rows].T.reshape(b, n, e)


def top2_gating_ref(x, w_gating, eps=1e-9):
    """Pure-JAX reference mirroring the PyTorch forward (reduce_token=False)."""
    raw = jax.nn.softmax(jnp.einsum("bnd,de->bne", x, w_gating), axis=-1)
    e = raw.shape[-1]
    idx1 = jnp.argmax(raw, axis=-1)
    gate1 = jnp.max(raw, axis=-1)
    mask1 = jax.nn.one_hot(idx1, e, dtype=raw.dtype)
    wo1 = raw * (1.0 - mask1)
    idx2 = jnp.argmax(wo1, axis=-1)
    gate2 = jnp.max(wo1, axis=-1)
    mask2 = jax.nn.one_hot(idx2, e, dtype=raw.dtype)
    denom = gate1 + gate2 + eps
    return mask1 * (gate1 / denom)[..., None] + mask2 * (gate2 / denom)[..., None]


if __name__ == "__main__":
    # Case 1: small shapes consistent with the module: b=2 groups, group_size=8 tokens,
    # dim=32 features, num_gates=8 experts.
    b, n, dim, num_gates = 2, 8, 32, 8
    key = jax.random.PRNGKey(0)
    kx, kw = jax.random.split(key)
    x = jax.random.normal(kx, (b, n, dim), dtype=jnp.float32)
    w_gating = jax.random.normal(kw, (dim, num_gates), dtype=jnp.float32)

    soft_gate = top2_gating(x, w_gating)
    jax.block_until_ready(soft_gate)
    ref = top2_gating_ref(x, w_gating)
    assert soft_gate.shape == (b, n, num_gates)
    assert jnp.allclose(soft_gate, ref, atol=1e-4, rtol=1e-4), "mismatch vs reference (case 1)"

    # Case 2: non-divisible row count + multi-step grid (exercises padding and the multi-tile
    # path with a deliberately small tile: rows=300 -> 3 tiles of 128 with 84 padded rows).
    b2, n2 = 2, 150
    x2 = jax.random.normal(jax.random.PRNGKey(1), (b2, n2, dim), dtype=jnp.float32)
    soft_gate2 = top2_gating(x2, w_gating, tm=128)
    jax.block_until_ready(soft_gate2)
    ref2 = top2_gating_ref(x2, w_gating)
    assert soft_gate2.shape == (b2, n2, num_gates)
    assert jnp.allclose(soft_gate2, ref2, atol=1e-4, rtol=1e-4), "mismatch vs reference (case 2)"

    print("KERNEL_OK")
</pallas_src>

<mosaic_0001>
module attributes {stable_mosaic.version = 11 : i64} {
  func.func @top2_gating_kernel(%arg0: i32, %arg1: memref<16x32xf32, #tpu.memory_space<vmem>>, %arg2: memref<8x32xf32, #tpu.memory_space<vmem>>, %arg3: memref<8x16xf32, #tpu.memory_space<vmem>>) attributes {dimension_semantics = [#tpu.dimension_semantics<parallel>], iteration_bounds = array<i64: 1>, scalar_prefetch = 0 : i64, scratch_operands = 0 : i64, tpu.core_type = #tpu.core_type<tc>, window_params = [{transform_indices = @transform_0, window_bounds = array<i64: 16, 32>}, {pipeline_mode = #tpu.pipeline_mode<synchronous>, transform_indices = @transform_1, window_bounds = array<i64: 8, 32>}, {transform_indices = @transform_2, window_bounds = array<i64: 8, 16>}]} {
    %c0 = arith.constant 0 : index
    %c0_0 = arith.constant 0 : index
    %0 = vector.load %arg2[%c0, %c0_0] : memref<8x32xf32, #tpu.memory_space<vmem>>, vector<8x32xf32>
    %c0_1 = arith.constant 0 : index
    %c0_2 = arith.constant 0 : index
    %1 = vector.load %arg1[%c0_1, %c0_2] : memref<16x32xf32, #tpu.memory_space<vmem>>, vector<16x32xf32>
    %cst = arith.constant dense<0.000000e+00> : vector<8x16xf32>
    %2 = tpu.matmul %0, %1, %cst {dimension_numbers = #tpu.dot_dimension_numbers<[1], [1], [0], [0], [0, 0, 1, 0], [], []>} : vector<8x32xf32>, vector<16x32xf32>, vector<8x16xf32> -> vector<8x16xf32>
    %cst_3 = arith.constant dense<0xFF800000> : vector<16xf32>
    %3 = vector.multi_reduction <maximumf>, %2, %cst_3 [0] : vector<8x16xf32> to vector<16xf32>
    %4 = vector.shape_cast %3 : vector<16xf32> to vector<1x16xf32>
    %5 = vector.broadcast %4 : vector<1x16xf32> to vector<8x16xf32>
    %6 = arith.subf %2, %5 : vector<8x16xf32>
    %7 = math.exp %6 : vector<8x16xf32>
    %cst_4 = arith.constant dense<0.000000e+00> : vector<16xf32>
    %8 = vector.multi_reduction <add>, %7, %cst_4 [0] : vector<8x16xf32> to vector<16xf32>
    %9 = vector.shape_cast %8 : vector<16xf32> to vector<1x16xf32>
    %10 = vector.broadcast %9 : vector<1x16xf32> to vector<8x16xf32>
    %11 = arith.divf %7, %10 : vector<8x16xf32>
    %12 = tpu.iota {dimensions = array<i32: 0>} : vector<8x16xi32>
    %cst_5 = arith.constant dense<0xFF800000> : vector<16xf32>
    %13 = vector.multi_reduction <maximumf>, %11, %cst_5 [0] : vector<8x16xf32> to vector<16xf32>
    %14 = vector.shape_cast %13 : vector<16xf32> to vector<1x16xf32>
    %15 = vector.broadcast %14 : vector<1x16xf32> to vector<8x16xf32>
    %16 = arith.cmpf oeq, %11, %15 : vector<8x16xf32>
    %c8_i32 = arith.constant 8 : i32
    %17 = vector.broadcast %c8_i32 : i32 to vector<8x16xi32>
    %18 = arith.select %16, %12, %17 : vector<8x16xi1>, vector<8x16xi32>
    %cst_6 = arith.constant dense<2147483647> : vector<16xi32>
    %19 = vector.multi_reduction <minsi>, %18, %cst_6 [0] : vector<8x16xi32> to vector<16xi32>
    %20 = vector.shape_cast %19 : vector<16xi32> to vector<1x16xi32>
    %21 = vector.broadcast %20 : vector<1x16xi32> to vector<8x16xi32>
    %22 = arith.cmpi eq, %12, %21 : vector<8x16xi32>
    %23 = arith.extui %22 : vector<8x16xi1> to vector<8x16xi32>
    %24 = arith.sitofp %23 : vector<8x16xi32> to vector<8x16xf32>
    %cst_7 = arith.constant 1.000000e+00 : f32
    %25 = vector.broadcast %cst_7 : f32 to vector<8x16xf32>
    %26 = arith.subf %25, %24 : vector<8x16xf32>
    %27 = arith.mulf %11, %26 : vector<8x16xf32>
    %cst_8 = arith.constant dense<0xFF800000> : vector<16xf32>
    %28 = vector.multi_reduction <maximumf>, %27, %cst_8 [0] : vector<8x16xf32> to vector<16xf32>
    %29 = vector.shape_cast %28 : vector<16xf32> to vector<1x16xf32>
    %30 = vector.broadcast %29 : vector<1x16xf32> to vector<8x16xf32>
    %31 = arith.cmpf oeq, %27, %30 : vector<8x16xf32>
    %c8_i32_9 = arith.constant 8 : i32
    %32 = vector.broadcast %c8_i32_9 : i32 to vector<8x16xi32>
    %33 = arith.select %31, %12, %32 : vector<8x16xi1>, vector<8x16xi32>
    %cst_10 = arith.constant dense<2147483647> : vector<16xi32>
    %34 = vector.multi_reduction <minsi>, %33, %cst_10 [0] : vector<8x16xi32> to vector<16xi32>
    %35 = vector.shape_cast %34 : vector<16xi32> to vector<1x16xi32>
    %36 = vector.broadcast %35 : vector<1x16xi32> to vector<8x16xi32>
    %37 = arith.cmpi eq, %12, %36 : vector<8x16xi32>
    %38 = arith.cmpi ne, %35, %20 : vector<1x16xi32>
    %39 = vector.broadcast %38 : vector<1x16xi1> to vector<8x16xi1>
    %40 = arith.andi %37, %39 : vector<8x16xi1>
    %41 = arith.extui %40 : vector<8x16xi1> to vector<8x16xi32>
    %42 = arith.sitofp %41 : vector<8x16xi32> to vector<8x16xf32>
    %43 = arith.addf %14, %29 : vector<1x16xf32>
    %cst_11 = arith.constant 9.99999971E-10 : f32
    %44 = vector.broadcast %cst_11 : f32 to vector<1x16xf32>
    %45 = arith.addf %43, %44 : vector<1x16xf32>
    %46 = arith.divf %14, %45 : vector<1x16xf32>
    %47 = vector.broadcast %46 : vector<1x16xf32> to vector<8x16xf32>
    %48 = arith.mulf %24, %47 : vector<8x16xf32>
    %49 = arith.divf %29, %45 : vector<1x16xf32>
    %50 = vector.broadcast %49 : vector<1x16xf32> to vector<8x16xf32>
    %51 = arith.mulf %42, %50 : vector<8x16xf32>
    %52 = arith.addf %48, %51 : vector<8x16xf32>
    %c0_12 = arith.constant 0 : index
    %c0_13 = arith.constant 0 : index
    %53 = vector.load %arg3[%c0_12, %c0_13] : memref<8x16xf32, #tpu.memory_space<vmem>>, vector<8x16xf32>
    tpu.vector_store %arg3[%c0_12, %c0_13], %52 {strides = array<i32>} : memref<8x16xf32, #tpu.memory_space<vmem>>, vector<8x16xf32>,
    return
  }
  func.func @transform_0(%arg0: i32) -> (i32, i32) {
    %c0_i32 = arith.constant 0 : i32
    %c0_i32_0 = arith.constant 0 : i32
    return %arg0, %c0_i32 : i32, i32
  }
  func.func @transform_1(%arg0: i32) -> (i32, i32) {
    %c0_i32 = arith.constant 0 : i32
    %c0_i32_0 = arith.constant 0 : i32
    %c0_i32_1 = arith.constant 0 : i32
    return %c0_i32, %c0_i32_0 : i32, i32
  }
  func.func @transform_2(%arg0: i32) -> (i32, i32) {
    %c0_i32 = arith.constant 0 : i32
    %c0_i32_0 = arith.constant 0 : i32
    return %c0_i32, %arg0 : i32, i32
  }
}

</mosaic_0001>

<llo_original>
// kernel: tpu_custom_call.1
$region0: #{tpu_custom_call.1}
  #allocation0 [shape = 'u32[]', space=smem, size = 0x4, offset = 0x4, fixed_abs, tag = 'smem constant byte address 0x4 - core index']
  #allocation1 [shape = 'u32[72,128]{1,0:T(1,128)}', space=vmem, size = 0x9000, scoped, tag = 'internal scratch']
  %s0 = inlined_call_operand.hbm [shape: f32[16,32], index: 0, kind: input, shape index: {}]
  %s1 = inlined_call_operand.hbm [shape: f32[8,32], index: 1, kind: input, shape index: {}]
  %s2 = inlined_call_operand.hbm [shape: f32[8,16], index: 2, kind: output, shape index: {}]
  %s3 = sld [smem:[#allocation0]]
  $region26: #{tpu_custom_call.1} parent=0
    _
  %s5 = ssub.s32 1, %s3
  %s6 = scalar_select 0, %s5, %s3
  $region1: #{tpu_custom_call.1} parent=0
    #allocation2 [shape = 'u8[8192]{0}', space=vmem, size = 0x2000, scoped, tag = 'input window, operand 0, single buffered']
    #allocation3 [shape = 's32[1]{0}', space=sflag, size = 0x4, scoped, tag = 'scoped memory for tpu_custom_call.1']
    #allocation4 [shape = 's32[1]{0}', space=sflag, size = 0x4, scoped, tag = 'scoped memory for tpu_custom_call.1']
    #allocation5 [shape = 'u8[4096]{0}', space=vmem, size = 0x1000, scoped, tag = 'input window, operand 1, single buffered']
    #allocation6 [shape = 's32[1]{0}', space=sflag, size = 0x4, scoped, tag = 'scoped memory for tpu_custom_call.1']
    #allocation7 [shape = 'u8[4096]{0}', space=vmem, size = 0x1000, scoped, tag = 'output window, operand 0, single buffered']
    %7 = vsyncpa [#allocation3], 0
    %8 = vsyncpa [#allocation6], 0
    %9 = vsyncpa [#allocation4], 0
    // Predicated region
    $region2: #{tpu_custom_call.1} parent=1 // pred_check
      _
    $region3: #{tpu_custom_call.1} parent=1 // pred_check_branch
      %11 = sbr.rel (0) target = $region5
    $region4: #{tpu_custom_call.1} parent=1 // pred_region
      %13 = vsyncadd [#allocation3], 0
      %s14 = sshll.u32 %s0, 4
      %s15 = int_to_ptr.hbm [resolvable:$true] %s14
      %s16 = sshll.u32 [#allocation2], 4
      %s17 = int_to_ptr.vmem [resolvable:$true] %s16
      %22 = dma.hbm_to_vmem [thread:$0]  %s15, 256, %s17, [#allocation3], 128, 128, 8
    $region5: #{tpu_custom_call.1} parent=1 // pred_fallthru
      _
    // Predicated region
    $region6: #{tpu_custom_call.1} parent=1 // pred_check
      _
    $region7: #{tpu_custom_call.1} parent=1 // pred_check_branch
      %24 = sbr.rel (0) target = $region9
    $region8: #{tpu_custom_call.1} parent=1 // pred_region
      %26 = vsyncadd [#allocation6], 0
      %s28 = sshll.u32 %s1, 4
      %s29 = int_to_ptr.hbm [resolvable:$true] %s28
      %s30 = sshll.u32 [#allocation5], 4
      %s31 = int_to_ptr.vmem [resolvable:$true] %s30
      %33 = dma.hbm_to_vmem [thread:$0]  %s29, 128, %s31, [#allocation6]
    $region9: #{tpu_custom_call.1} parent=1 // pred_fallthru
      _
    // Predicated region
    $region10: #{tpu_custom_call.1} parent=1 // pred_check
      _
    $region11: #{tpu_custom_call.1} parent=1 // pred_check_branch
      %35 = sbr.rel (0) target = $region13
    $region12: #{tpu_custom_call.1} parent=1 // pred_region
      %37 = dma.done [#allocation3], 256
    $region13: #{tpu_custom_call.1} parent=1 // pred_fallthru
      _
    // Predicated region
    $region14: #{tpu_custom_call.1} parent=1 // pred_check
      _
    $region15: #{tpu_custom_call.1} parent=1 // pred_check_branch
      %39 = sbr.rel (0) target = $region17
    $region16: #{tpu_custom_call.1} parent=1 // pred_region
      %41 = dma.done [#allocation6], 128
    $region17: #{tpu_custom_call.1} parent=1 // pred_fallthru
      _
    %v42 = vld [vmem:[#allocation5] sm:$0xff]
    %v43 = vld [vmem:[#allocation2] sm:$0xff]
    %v44 = vld [vmem:[#allocation2 + $0x8] sm:$0xff]
    %vm45 = vcmask 261120
    %v47 = vsel %vm45, %v42, 0
    %v50 = vsel %vm45, %v43, 0
    %v53 = vsel %vm45, %v44, 0
    %55 = vmatpush.xpose.msra.mxu0 0.0
    %56 = vmatpush.xpose.msra.mxu0 0.0
    %57 = vmatpush.xpose.msra.mxu0 0.0
    %58 = vmatpush.xpose.msra.mxu0 0.0
    %59 = vmatpush.xpose.msra.mxu0 0.0
    %60 = vmatpush.xpose.msra.mxu0 0.0
    %61 = vmatpush.xpose.msra.mxu0 0.0
    %62 = vmatpush.xpose.msra.mxu0 0.0
    %63 = vmatpush.xpose.msra.mxu0 0.0
    %64 = vmatpush.xpose.msra.mxu0 0.0
    %65 = vmatpush.xpose.msra.mxu0 0.0
    %66 = vmatpush.xpose.msra.mxu0 0.0
    %67 = vmatpush.xpose.msra.mxu0 0.0
    %68 = vmatpush.xpose.msra.mxu0 0.0
    %69 = vmatpush.xpose.msra.mxu0 %v53
    %70 = vmatpush.xpose.msra.mxu0 %v50
    %71 = vmatmul.f32.gmra.mxu0 %v47
    %v72 = vpop.f32.mrf.mxu0
    %v73 = vadd.f32 0.0, %v72
    %74 = vdwg.mxu0
    %vm75 = vcmask 130048
    %v76 = vsel %vm75, %v73, -inf
    %v77 = vrot.slane %v76, 4
    %v78 = vmax.f32 %v76, %v77
    %v79 = vrot.slane %v78, 2
    %v80 = vmax.f32 %v78, %v79
    %v81 = vrot.slane %v80, 1
    %v82 = vmax.f32 %v80, %v81
    %v83 = vsub.f32 %v73, %v82
    %v84 = vmul.f32 %v83, 1.442695
    %v85 = vpow.pop %v84
    %v86 = vsel %vm75, %v85, 0.0
    %v87 = vrot.slane %v86, 4
    %v88 = vadd.f32 %v86, %v87
    %v89 = vrot.slane %v88, 2
    %v90 = vadd.f32 %v88, %v89
    %v91 = vrot.slane %v90, 1
    %v92 = vadd.f32 %v90, %v91
    %v93 = vrcp.pop %v92
    %v94 = vmul.f32 %v92, %v93
    %v95 = vsub.f32 1.0, %v94
    %v96 = vmul.f32 %v93, %v95
    %v97 = vadd.f32 %v93, %v96
    %vm98 = vweird.f32 %v92
    %vm99 = vweird.f32 %v93
    %vm100 = vmor %vm98, %vm99
    %v101 = vsel %vm100, %v93, %v97
    %v102 = vand.u32 2147483647, %v92
    %vm103 = vcmp.eq.f32.partialorder %v102, 8.507059e+37
    %v104 = vand.u32 %v92, 2147483648
    %v105 = vor.u32 1.1754944e-38, %v104
    %v106 = vsel %vm103, %v105, %v101
    %v107 = vmul.f32 %v85, %v106
    %v108 = vlaneseq
    %v109 = vshrl.u32 %v108, 7
    %v110 = vsel %vm75, %v107, -inf
    %v111 = vrot.slane %v110, 4
    %v112 = vmax.f32 %v110, %v111
    %v113 = vrot.slane %v112, 2
    %v114 = vmax.f32 %v112, %v113
    %v115 = vrot.slane %v114, 1
    %v116 = vmax.f32 %v114, %v115
    %vm117 = vcmp.eq.f32.partialorder %v107, %v116
    %v118 = vsel %vm117, %v109, 8
    %v119 = vsel %vm75, %v118, 2147483647
    %v120 = vrot.slane %v119, 4
    %vm121 = vcmp.lt.s32.totalorder %v119, %v120
    %v122 = vsel %vm121, %v119, %v120
    %v123 = vrot.slane %v122, 2
    %vm124 = vcmp.lt.s32.totalorder %v122, %v123
    %v125 = vsel %vm124, %v122, %v123
    %v126 = vrot.slane %v125, 1
    %vm127 = vcmp.lt.s32.totalorder %v125, %v126
    %v128 = vsel %vm127, %v125, %v126
    %vm129 = vcmp.eq.s32.totalorder %v109, %v128
    %v130 = vsel %vm129, 1, 0
    %v131 = vcvt.s32.f32 %v130
    %v132 = vsub.f32 1.0, %v131
    %v133 = vmul.f32 %v107, %v132
    %v134 = vsel %vm75, %v133, -inf
    %v135 = vrot.slane %v134, 4
    %v136 = vmax.f32 %v134, %v135
    %v137 = vrot.slane %v136, 2
    %v138 = vmax.f32 %v136, %v137
    %v139 = vrot.slane %v138, 1
    %v140 = vmax.f32 %v138, %v139
    %vm141 = vcmp.eq.f32.partialorder %v133, %v140
    %v142 = vsel %vm141, %v109, 8
    %v143 = vsel %vm75, %v142, 2147483647
    %v144 = vrot.slane %v143, 4
    %vm145 = vcmp.lt.s32.totalorder %v143, %v144
    %v146 = vsel %vm145, %v143, %v144
    %v147 = vrot.slane %v146, 2
    %vm148 = vcmp.lt.s32.totalorder %v146, %v147
    %v149 = vsel %vm148, %v146, %v147
    %v150 = vrot.slane %v149, 1
    %vm151 = vcmp.lt.s32.totalorder %v149, %v150
    %v152 = vsel %vm151, %v149, %v150
    %vm153 = vcmp.eq.s32.totalorder %v109, %v152
    %vm154 = vcmp.ne.s32.totalorder %v152, %v128
    %v155 = vsel %vm154, 1, 0
    %vm156 = vcmp.eq.s32.totalorder %v155, 1
    %vm157 = vmand %vm153, %vm156
    %v158 = vsel %vm157, 1, 0
    %v159 = vcvt.s32.f32 %v158
    %v160 = vadd.f32 %v116, %v140
    %v161 = vadd.f32 %v160, 1e-09
    %v162 = vrcp.pop %v161
    %v163 = vmul.f32 %v161, %v162
    %v164 = vsub.f32 1.0, %v163
    %v165 = vmul.f32 %v162, %v164
    %v166 = vadd.f32 %v162, %v165
    %vm167 = vweird.f32 %v161
    %vm168 = vweird.f32 %v162
    %vm169 = vmor %vm167, %vm168
    %v170 = vsel %vm169, %v162, %v166
    %v171 = vand.u32 2147483647, %v161
    %vm172 = vcmp.eq.f32.partialorder %v171, 8.507059e+37
    %v173 = vand.u32 %v161, 2147483648
    %v174 = vor.u32 1.1754944e-38, %v173
    %v175 = vsel %vm172, %v174, %v170
    %v176 = vmul.f32 %v116, %v175
    %v177 = vmul.f32 %v131, %v176
    %v178 = vmul.f32 %v140, %v175
    %v179 = vmul.f32 %v159, %v178
    %v180 = vadd.f32 %v177, %v179
    %181 = vst.msk [vmem:[#allocation7] sm:$0xff] %vm75, %v180
    // Predicated region
    $region18: #{tpu_custom_call.1} parent=1 // pred_check
      _
    $region19: #{tpu_custom_call.1} parent=1 // pred_check_branch
      %183 = sbr.rel (0) target = $region21
    $region20: #{tpu_custom_call.1} parent=1 // pred_region
      %185 = vsyncadd [#allocation4], 0
      %s187 = sshll.u32 [#allocation7], 4
      %s188 = int_to_ptr.vmem [resolvable:$true] %s187
      %s189 = sshll.u32 %s2, 4
      %s190 = int_to_ptr.hbm [resolvable:$true] %s189
      %192 = dma.vmem_to_hbm [thread:$0]  %s188, 128, %s190, [#allocation4]
    $region21: #{tpu_custom_call.1} parent=1 // pred_fallthru
      _
    // Predicated region
    $region22: #{tpu_custom_call.1} parent=1 // pred_check
      _
    $region23: #{tpu_custom_call.1} parent=1 // pred_check_branch
      %194 = sbr.rel (0) target = $region25
    $region24: #{tpu_custom_call.1} parent=1 // pred_region
      %196 = dma.done [#allocation4], 128
    $region25: #{tpu_custom_call.1} parent=1 // pred_fallthru
      _
    %197 = vsyncpa [#allocation3], 1
    %198 = vsyncpa [#allocation6], 1
    %199 = vsyncpa [#allocation4], 1

</llo_original>
